<compile_context>
chip_gen: v7x
topology: tpu7x:2x2x1
jax: 0.10.0
libtpu: 0.0.40
codegen_flags: <defaults>
</compile_context>

<pallas_src>
import functools

import jax
import jax.numpy as jnp
from jax.experimental import pallas as pl
from jax.experimental.pallas import tpu as pltpu


# Assume up to 2 TensorCores per chip (v7x); harmless on 1-TC v5e/v6e.
_TC_PER_CHIP = 2
_VMEM_LIMIT_BYTES = 48 * 1024 * 1024   # < v7x 64 MiB physical, fine on v5e/v6e.


# ----------------------------------------------------------------------------
# Pallas kernel: fused linear autoencoder (two matmuls + one bias add).
# ----------------------------------------------------------------------------
def _ae_kernel(x_ref, w1_ref, w23_ref, b_ref, o_ref):
    # x: [TB, 784], w1: [784, layer], w23: [layer, 784], b: [1, 784] (f32)
    h = jnp.dot(x_ref[...], w1_ref[...], preferred_element_type=jnp.float32)
    y = jnp.dot(h.astype(w23_ref.dtype), w23_ref[...],
                preferred_element_type=jnp.float32)
    # Bias add / epilogue kept in f32 (safe on v5e: no bf16 VPU there).
    o_ref[...] = (y + b_ref[...]).astype(o_ref.dtype)


def _round_up(n, m):
    return ((n + m - 1) // m) * m


@functools.partial(jax.jit, static_argnames=("tile_b", "use_bf16"))
def linear_ae_lc_forward(x_nchw, params, tile_b=1024, use_bf16=False):
    """x_nchw: [B, 1, 28, 28] -> [B, 1, 28, 28] (same layout as the PyTorch module)."""
    w1, b1, w2, b2, w3, b3 = params
    B = x_nchw.shape[0]
    d_in = w1.shape[0]            # 784
    d_layer = w1.shape[1]         # layer_size

    # Fuse the latent layer into the decoder weight; fold all biases into one
    # output-wide bias (tiny wrapper-side matmuls, done once per call).
    w23 = jnp.dot(w2, w3, preferred_element_type=jnp.float32)        # [layer, 784]
    b_total = (b1 @ w23 + b2 @ w3 + b3).astype(jnp.float32)          # [1, 784]

    # nn.Flatten
    x_flat = x_nchw.reshape(B, -1).astype(jnp.float32)

    # Optional reduced-precision storage (bf16 weights/activations, f32 accum).
    if use_bf16:
        io_dtype = jnp.bfloat16
        x_flat = x_flat.astype(io_dtype)
        w1_k = w1.astype(io_dtype)
        w23_k = w23.astype(io_dtype)
    else:
        io_dtype = jnp.float32
        w1_k = w1.astype(jnp.float32)
        w23_k = w23

    # Batch tile: multiple of 8; capped so (a) tiny batches don't allocate huge
    # blocks and (b) the grid has >=2 steps when possible (v7x megacore).
    tb = min(tile_b, _round_up(pl.cdiv(B, _TC_PER_CHIP), 8))
    grid = (pl.cdiv(B, tb),)

    itemsize = jnp.dtype(io_dtype).itemsize
    cost = pl.CostEstimate(
        flops=2 * B * d_in * d_layer * 2,                     # two matmuls
        transcendentals=0,
        bytes_accessed=itemsize * (2 * B * d_in + 2 * d_in * d_layer) + 4 * d_in,
    )

    out_flat = pl.pallas_call(
        _ae_kernel,
        out_shape=jax.ShapeDtypeStruct((B, d_in), io_dtype),
        grid_spec=pltpu.PrefetchScalarGridSpec(
            num_scalar_prefetch=0,
            grid=grid,
            in_specs=[
                pl.BlockSpec((tb, d_in), lambda i: (i, 0)),       # x tile
                pl.BlockSpec((d_in, d_layer), lambda i: (0, 0)),  # W1 (in, out)
                pl.BlockSpec((d_layer, d_in), lambda i: (0, 0)),  # W2 @ W3
                pl.BlockSpec((1, d_in), lambda i: (0, 0)),        # folded bias (f32)
            ],
            out_specs=pl.BlockSpec((tb, d_in), lambda i: (i, 0)),
        ),
        compiler_params=pltpu.CompilerParams(
            dimension_semantics=("parallel",),
            vmem_limit_bytes=_VMEM_LIMIT_BYTES,
        ),
        cost_estimate=cost,
    )(x_flat, w1_k, w23_k, b_total)

    # nn.Unflatten(-1, (1, 28, 28))
    return out_flat.reshape(B, 1, 28, 28)


# ----------------------------------------------------------------------------
# Deterministic parameter init (mirrors nn.init.orthogonal_ + zero bias).
# ----------------------------------------------------------------------------
def _orthogonal(key, out_dim, in_dim):
    """Orthogonal matrix of shape (out_dim, in_dim), like nn.init.orthogonal_."""
    big, small = max(out_dim, in_dim), min(out_dim, in_dim)
    a = jax.random.normal(key, (big, small), dtype=jnp.float32)
    q, r = jnp.linalg.qr(a)
    q = q * jnp.sign(jnp.diagonal(r))[None, :]
    w = q if out_dim >= in_dim else q.T
    return w.astype(jnp.float32)


def make_params(key, input_size, layer_size, latent_size):
    k1, k2, k3 = jax.random.split(key, 3)
    # PyTorch Linear weights are (out, in); store transposed (in, out) for kernel.
    w1 = _orthogonal(k1, layer_size, input_size).T      # [784, layer]
    w2 = _orthogonal(k2, latent_size, layer_size).T     # [layer, latent]
    w3 = _orthogonal(k3, input_size, latent_size).T     # [latent, 784]
    b1 = jnp.zeros((1, layer_size), jnp.float32)
    b2 = jnp.zeros((1, latent_size), jnp.float32)
    b3 = jnp.zeros((1, input_size), jnp.float32)
    return (w1, b1, w2, b2, w3, b3)


if __name__ == "__main__":
    # config = {'input_size': (1, 28, 28), 'layer_size': 32, 'latent_size': 16}
    INPUT_SIZE = 1 * 28 * 28
    LAYER_SIZE = 32
    LATENT_SIZE = 16
    B = 2

    key = jax.random.PRNGKey(0)
    kx, kp = jax.random.split(key)

    x = jax.random.normal(kx, (B, 1, 28, 28), dtype=jnp.float32)
    params = make_params(kp, INPUT_SIZE, LAYER_SIZE, LATENT_SIZE)

    out = linear_ae_lc_forward(x, params)          # default: f32, matches module
    out = jax.block_until_ready(out)

    # Pure-JAX reference of the ORIGINAL (unfused) three-layer chain.
    w1, b1, w2, b2, w3, b3 = params
    xf = x.reshape(B, -1)
    ref = ((xf @ w1 + b1) @ w2 + b2) @ w3 + b3
    ref = ref.reshape(B, 1, 28, 28)
    assert out.shape == (B, 1, 28, 28)
    assert jnp.allclose(out, ref, atol=1e-4, rtol=1e-4)

    # Optional reduced-precision storage path (bf16 I/O, f32 accumulation).
    out_bf16 = jax.block_until_ready(linear_ae_lc_forward(x, params, use_bf16=True))
    assert out_bf16.shape == (B, 1, 28, 28)
    assert jnp.allclose(out_bf16.astype(jnp.float32), ref, atol=3e-2, rtol=3e-2)

    print("KERNEL_OK")
</pallas_src>

<mosaic_0001>
module attributes {stable_mosaic.version = 11 : i64} {
  func.func @_ae_kernel(%arg0: i32, %arg1: memref<8x784xf32, #tpu.memory_space<vmem>>, %arg2: memref<784x32xf32, #tpu.memory_space<vmem>>, %arg3: memref<32x784xf32, #tpu.memory_space<vmem>>, %arg4: memref<1x784xf32, #tpu.memory_space<vmem>>, %arg5: memref<8x784xf32, #tpu.memory_space<vmem>>) attributes {dimension_semantics = [#tpu.dimension_semantics<parallel>], iteration_bounds = array<i64: 1>, scalar_prefetch = 0 : i64, scratch_operands = 0 : i64, tpu.core_type = #tpu.core_type<tc>, window_params = [{transform_indices = @transform_0, window_bounds = array<i64: 8, 784>}, {pipeline_mode = #tpu.pipeline_mode<synchronous>, transform_indices = @transform_1, window_bounds = array<i64: 784, 32>}, {pipeline_mode = #tpu.pipeline_mode<synchronous>, transform_indices = @transform_2, window_bounds = array<i64: 32, 784>}, {pipeline_mode = #tpu.pipeline_mode<synchronous>, transform_indices = @transform_3, window_bounds = array<i64: 1, 784>}, {transform_indices = @transform_4, window_bounds = array<i64: 8, 784>}]} {
    %c0 = arith.constant 0 : index
    %c0_0 = arith.constant 0 : index
    %0 = vector.load %arg1[%c0, %c0_0] : memref<8x784xf32, #tpu.memory_space<vmem>>, vector<8x784xf32>
    %c0_1 = arith.constant 0 : index
    %c0_2 = arith.constant 0 : index
    %1 = vector.load %arg2[%c0_1, %c0_2] : memref<784x32xf32, #tpu.memory_space<vmem>>, vector<784x32xf32>
    %cst = arith.constant dense<0.000000e+00> : vector<8x32xf32>
    %2 = tpu.matmul %0, %1, %cst {dimension_numbers = #tpu.dot_dimension_numbers<[1], [0], [0], [1], [0, 0, 1, 1], [], []>} : vector<8x784xf32>, vector<784x32xf32>, vector<8x32xf32> -> vector<8x32xf32>
    %c0_3 = arith.constant 0 : index
    %c0_4 = arith.constant 0 : index
    %3 = vector.load %arg3[%c0_3, %c0_4] : memref<32x784xf32, #tpu.memory_space<vmem>>, vector<32x784xf32>
    %cst_5 = arith.constant dense<0.000000e+00> : vector<8x784xf32>
    %4 = tpu.matmul %2, %3, %cst_5 {dimension_numbers = #tpu.dot_dimension_numbers<[1], [0], [0], [1], [0, 0, 1, 1], [], []>} : vector<8x32xf32>, vector<32x784xf32>, vector<8x784xf32> -> vector<8x784xf32>
    %c0_6 = arith.constant 0 : index
    %c0_7 = arith.constant 0 : index
    %5 = vector.load %arg4[%c0_6, %c0_7] : memref<1x784xf32, #tpu.memory_space<vmem>>, vector<1x784xf32>
    %6 = vector.broadcast %5 : vector<1x784xf32> to vector<8x784xf32>
    %7 = arith.addf %4, %6 : vector<8x784xf32>
    %c0_8 = arith.constant 0 : index
    %c0_9 = arith.constant 0 : index
    %8 = vector.load %arg5[%c0_8, %c0_9] : memref<8x784xf32, #tpu.memory_space<vmem>>, vector<8x784xf32>
    tpu.vector_store %arg5[%c0_8, %c0_9], %7 {strides = array<i32>} : memref<8x784xf32, #tpu.memory_space<vmem>>, vector<8x784xf32>,
    return
  }
  func.func @transform_0(%arg0: i32) -> (i32, i32) {
    %c0_i32 = arith.constant 0 : i32
    %c0_i32_0 = arith.constant 0 : i32
    return %arg0, %c0_i32 : i32, i32
  }
  func.func @transform_1(%arg0: i32) -> (i32, i32) {
    %c0_i32 = arith.constant 0 : i32
    %c0_i32_0 = arith.constant 0 : i32
    %c0_i32_1 = arith.constant 0 : i32
    return %c0_i32, %c0_i32_0 : i32, i32
  }
  func.func @transform_2(%arg0: i32) -> (i32, i32) {
    %c0_i32 = arith.constant 0 : i32
    %c0_i32_0 = arith.constant 0 : i32
    %c0_i32_1 = arith.constant 0 : i32
    return %c0_i32, %c0_i32_0 : i32, i32
  }
  func.func @transform_3(%arg0: i32) -> (i32, i32) {
    %c0_i32 = arith.constant 0 : i32
    %c0_i32_0 = arith.constant 0 : i32
    %c0_i32_1 = arith.constant 0 : i32
    return %c0_i32, %c0_i32_0 : i32, i32
  }
  func.func @transform_4(%arg0: i32) -> (i32, i32) {
    %c0_i32 = arith.constant 0 : i32
    %c0_i32_0 = arith.constant 0 : i32
    return %arg0, %c0_i32 : i32, i32
  }
}

</mosaic_0001>

<llo_original>
// kernel: linear_ae_lc_forward.1
$region0: #{linear_ae_lc_forward.1}
  #allocation0 [shape = 'u32[]', space=smem, size = 0x4, offset = 0x4, fixed_abs, tag = 'smem constant byte address 0x4 - core index']
  #allocation1 [shape = 'u32[144,128]{1,0:T(1,128)}', space=vmem, size = 0x12000, scoped, tag = 'internal scratch']
  %s0 = inlined_call_operand.vmem [shape: f32[2,784], index: 0, kind: input, shape index: {}]
  %s1 = inlined_call_operand.vmem [shape: f32[784,32], index: 1, kind: input, shape index: {}]
  %s2 = inlined_call_operand.vmem [shape: f32[32,784], index: 2, kind: input, shape index: {}]
  %s3 = inlined_call_operand.vmem [shape: f32[1,784], index: 3, kind: input, shape index: {}]
  %s4 = inlined_call_operand.vmem [shape: f32[2,784], index: 4, kind: output, shape index: {}]
  %s5 = sld [smem:[#allocation0]]
  $region48: #{linear_ae_lc_forward.1} parent=0
    _
  %s7 = ssub.s32 1, %s5
  %s8 = scalar_select 0, %s7, %s5
  $region1: #{linear_ae_lc_forward.1} parent=0
    #allocation2 [shape = 'u8[28672]{0}', space=vmem, size = 0x7000, scoped, tag = 'output window, operand 0, single buffered']
    // Predicated region
    $region2: #{linear_ae_lc_forward.1} parent=1 // pred_check
      _
    $region3: #{linear_ae_lc_forward.1} parent=1 // pred_check_branch
      %10 = sbr.rel (0) target = $region5
    $region4: #{linear_ae_lc_forward.1} parent=1 // pred_region
      _
    $region5: #{linear_ae_lc_forward.1} parent=1 // pred_fallthru
      _
    // Predicated region
    $region6: #{linear_ae_lc_forward.1} parent=1 // pred_check
      _
    $region7: #{linear_ae_lc_forward.1} parent=1 // pred_check_branch
      %12 = sbr.rel (0) target = $region9
    $region8: #{linear_ae_lc_forward.1} parent=1 // pred_region
      _
    $region9: #{linear_ae_lc_forward.1} parent=1 // pred_fallthru
      _
    // Predicated region
    $region10: #{linear_ae_lc_forward.1} parent=1 // pred_check
      _
    $region11: #{linear_ae_lc_forward.1} parent=1 // pred_check_branch
      %14 = sbr.rel (0) target = $region13
    $region12: #{linear_ae_lc_forward.1} parent=1 // pred_region
      _
    $region13: #{linear_ae_lc_forward.1} parent=1 // pred_fallthru
      _
    // Predicated region
    $region14: #{linear_ae_lc_forward.1} parent=1 // pred_check
      _
    $region15: #{linear_ae_lc_forward.1} parent=1 // pred_check_branch
      %16 = sbr.rel (0) target = $region17
    $region16: #{linear_ae_lc_forward.1} parent=1 // pred_region
      _
    $region17: #{linear_ae_lc_forward.1} parent=1 // pred_fallthru
      _
    %v17 = vld [vmem:[%s0] sm:$0xff]
    %v18 = vld [vmem:[%s0 + $0x8] sm:$0x3f]
    %v19 = vld [vmem:[%s0 + $0xe] sm:$0xff]
    %v20 = vld [vmem:[%s0 + $0x16] sm:$0x3f]
    %v21 = vld [vmem:[%s0 + $0x1c] sm:$0xff]
    %v22 = vld [vmem:[%s0 + $0x24] sm:$0x3f]
    %v23 = vld [vmem:[%s0 + $0x2a] sm:$0xff]
    %v24 = vld [vmem:[%s0 + $0x32] sm:$0x3f]
    %v25 = vld [vmem:[%s1] sm:$0xff]
    %v26 = vld [vmem:[%s1 + $0x8] sm:$0xff]
    %v27 = vld [vmem:[%s1 + $0x10] sm:$0xff]
    %v28 = vld [vmem:[%s1 + $0x18] sm:$0xff]
    %v29 = vld [vmem:[%s1 + $0x20] sm:$0xff]
    %v30 = vld [vmem:[%s1 + $0x28] sm:$0xff]
    %v31 = vld [vmem:[%s1 + $0x30] sm:$0xff]
    %v32 = vld [vmem:[%s1 + $0x38] sm:$0xff]
    %v33 = vld [vmem:[%s1 + $0x40] sm:$0xff]
    %v34 = vld [vmem:[%s1 + $0x48] sm:$0xff]
    %v35 = vld [vmem:[%s1 + $0x50] sm:$0xff]
    %v36 = vld [vmem:[%s1 + $0x58] sm:$0xff]
    %v37 = vld [vmem:[%s1 + $0x60] sm:$0xff]
    %v38 = vld [vmem:[%s1 + $0x68] sm:$0xff]
    %v39 = vld [vmem:[%s1 + $0x70] sm:$0xff]
    %v40 = vld [vmem:[%s1 + $0x78] sm:$0xff]
    %v41 = vld [vmem:[%s1 + $0x80] sm:$0xff]
    %v42 = vld [vmem:[%s1 + $0x88] sm:$0xff]
    %v43 = vld [vmem:[%s1 + $0x90] sm:$0xff]
    %v44 = vld [vmem:[%s1 + $0x98] sm:$0xff]
    %v45 = vld [vmem:[%s1 + $0xa0] sm:$0xff]
    %v46 = vld [vmem:[%s1 + $0xa8] sm:$0xff]
    %v47 = vld [vmem:[%s1 + $0xb0] sm:$0xff]
    %v48 = vld [vmem:[%s1 + $0xb8] sm:$0xff]
    %v49 = vld [vmem:[%s1 + $0xc0] sm:$0xff]
    %v50 = vld [vmem:[%s1 + $0xc8] sm:$0xff]
    %v51 = vld [vmem:[%s1 + $0xd0] sm:$0xff]
    %v52 = vld [vmem:[%s1 + $0xd8] sm:$0xff]
    %v53 = vld [vmem:[%s1 + $0xe0] sm:$0xff]
    %v54 = vld [vmem:[%s1 + $0xe8] sm:$0xff]
    %v55 = vld [vmem:[%s1 + $0xf0] sm:$0xff]
    %v56 = vld [vmem:[%s1 + $0xf8] sm:$0xff]
    %v57 = vld [vmem:[%s1 + $0x100] sm:$0xff]
    %v58 = vld [vmem:[%s1 + $0x108] sm:$0xff]
    %v59 = vld [vmem:[%s1 + $0x110] sm:$0xff]
    %v60 = vld [vmem:[%s1 + $0x118] sm:$0xff]
    %v61 = vld [vmem:[%s1 + $0x120] sm:$0xff]
    %v62 = vld [vmem:[%s1 + $0x128] sm:$0xff]
    %v63 = vld [vmem:[%s1 + $0x130] sm:$0xff]
    %v64 = vld [vmem:[%s1 + $0x138] sm:$0xff]
    %v65 = vld [vmem:[%s1 + $0x140] sm:$0xff]
    %v66 = vld [vmem:[%s1 + $0x148] sm:$0xff]
    %v67 = vld [vmem:[%s1 + $0x150] sm:$0xff]
    %v68 = vld [vmem:[%s1 + $0x158] sm:$0xff]
    %v69 = vld [vmem:[%s1 + $0x160] sm:$0xff]
    %v70 = vld [vmem:[%s1 + $0x168] sm:$0xff]
    %v71 = vld [vmem:[%s1 + $0x170] sm:$0xff]
    %v72 = vld [vmem:[%s1 + $0x178] sm:$0xff]
    %v73 = vld [vmem:[%s1 + $0x180] sm:$0xff]
    %v74 = vld [vmem:[%s1 + $0x188] sm:$0xff]
    %v75 = vld [vmem:[%s1 + $0x190] sm:$0xff]
    %v76 = vld [vmem:[%s1 + $0x198] sm:$0xff]
    %v77 = vld [vmem:[%s1 + $0x1a0] sm:$0xff]
    %v78 = vld [vmem:[%s1 + $0x1a8] sm:$0xff]
    %v79 = vld [vmem:[%s1 + $0x1b0] sm:$0xff]
    %v80 = vld [vmem:[%s1 + $0x1b8] sm:$0xff]
    %v81 = vld [vmem:[%s1 + $0x1c0] sm:$0xff]
    %v82 = vld [vmem:[%s1 + $0x1c8] sm:$0xff]
    %v83 = vld [vmem:[%s1 + $0x1d0] sm:$0xff]
    %v84 = vld [vmem:[%s1 + $0x1d8] sm:$0xff]
    %v85 = vld [vmem:[%s1 + $0x1e0] sm:$0xff]
    %v86 = vld [vmem:[%s1 + $0x1e8] sm:$0xff]
    %v87 = vld [vmem:[%s1 + $0x1f0] sm:$0xff]
    %v88 = vld [vmem:[%s1 + $0x1f8] sm:$0xff]
    %v89 = vld [vmem:[%s1 + $0x200] sm:$0xff]
    %v90 = vld [vmem:[%s1 + $0x208] sm:$0xff]
    %v91 = vld [vmem:[%s1 + $0x210] sm:$0xff]
    %v92 = vld [vmem:[%s1 + $0x218] sm:$0xff]
    %v93 = vld [vmem:[%s1 + $0x220] sm:$0xff]
    %v94 = vld [vmem:[%s1 + $0x228] sm:$0xff]
    %v95 = vld [vmem:[%s1 + $0x230] sm:$0xff]
    %v96 = vld [vmem:[%s1 + $0x238] sm:$0xff]
    %v97 = vld [vmem:[%s1 + $0x240] sm:$0xff]
    %v98 = vld [vmem:[%s1 + $0x248] sm:$0xff]
    %v99 = vld [vmem:[%s1 + $0x250] sm:$0xff]
    %v100 = vld [vmem:[%s1 + $0x258] sm:$0xff]
    %v101 = vld [vmem:[%s1 + $0x260] sm:$0xff]
    %v102 = vld [vmem:[%s1 + $0x268] sm:$0xff]
    %v103 = vld [vmem:[%s1 + $0x270] sm:$0xff]
    %v104 = vld [vmem:[%s1 + $0x278] sm:$0xff]
    %v105 = vld [vmem:[%s1 + $0x280] sm:$0xff]
    %v106 = vld [vmem:[%s1 + $0x288] sm:$0xff]
    %v107 = vld [vmem:[%s1 + $0x290] sm:$0xff]
    %v108 = vld [vmem:[%s1 + $0x298] sm:$0xff]
    %v109 = vld [vmem:[%s1 + $0x2a0] sm:$0xff]
    %v110 = vld [vmem:[%s1 + $0x2a8] sm:$0xff]
    %v111 = vld [vmem:[%s1 + $0x2b0] sm:$0xff]
    %v112 = vld [vmem:[%s1 + $0x2b8] sm:$0xff]
    %v113 = vld [vmem:[%s1 + $0x2c0] sm:$0xff]
    %v114 = vld [vmem:[%s1 + $0x2c8] sm:$0xff]
    %v115 = vld [vmem:[%s1 + $0x2d0] sm:$0xff]
    %v116 = vld [vmem:[%s1 + $0x2d8] sm:$0xff]
    %v117 = vld [vmem:[%s1 + $0x2e0] sm:$0xff]
    %v118 = vld [vmem:[%s1 + $0x2e8] sm:$0xff]
    %v119 = vld [vmem:[%s1 + $0x2f0] sm:$0xff]
    %v120 = vld [vmem:[%s1 + $0x2f8] sm:$0xff]
    %v121 = vld [vmem:[%s1 + $0x300] sm:$0xff]
    %v122 = vld [vmem:[%s1 + $0x308] sm:$0xff]
    %v131 = vcombine.low %v17, %v19
    %v132 = vcombine.high %v17, %v19
    %v133 = vcombine.low %v21, %v23
    %v134 = vcombine.high %v21, %v23
    %v136 = vunpack.c.l.s4 1983009808
    %v137 = vunpack.c.0.s8 %v136
    %v138 = vlaneseq
    %v139 = vshrl.u32 %v138, 7
    %v140 = vsub.s32 %v137, %v139
    %v141 = vrot.slane %v131, %v140
    %v143 = vunpack.c.l.s4 1983009808
    %v144 = vunpack.c.0.s8 %v143
    %v145 = vlaneseq
    %v146 = vshrl.u32 %v145, 7
    %v147 = vsub.s32 %v144, %v146
    %v148 = vrot.slane %v132, %v147
    %v150 = vunpack.c.l.s4 1983009808
    %v151 = vunpack.c.0.s8 %v150
    %v152 = vlaneseq
    %v153 = vshrl.u32 %v152, 7
    %v154 = vsub.s32 %v151, %v153
    %v155 = vrot.slane %v133, %v154
    %v157 = vunpack.c.l.s4 1983009808
    %v158 = vunpack.c.0.s8 %v157
    %v159 = vlaneseq
    %v160 = vshrl.u32 %v159, 7
    %v161 = vsub.s32 %v158, %v160
    %v162 = vrot.slane %v134, %v161
    %v163 = vcombine.low %v141, %v155
    %v164 = vcombine.high %v141, %v155
    %v165 = vcombine.low %v148, %v162
    %v166 = vcombine.high %v148, %v162
    %v167 = vcombine.low %v18, %v20
    %v168 = vcombine.high %v18, %v20
    %v169 = vcombine.low %v22, %v24
    %v170 = vcombine.high %v22, %v24
    %v172 = vunpack.c.l.s4 1983009808
    %v173 = vunpack.c.0.s8 %v172
    %v174 = vlaneseq
    %v175 = vshrl.u32 %v174, 7
    %v176 = vsub.s32 %v173, %v175
    %v177 = vrot.slane %v167, %v176
    %v179 = vunpack.c.l.s4 1983009808
    %v180 = vunpack.c.0.s8 %v179
    %v181 = vlaneseq
    %v182 = vshrl.u32 %v181, 7
    %v183 = vsub.s32 %v180, %v182
    %v184 = vrot.slane %v168, %v183
    %v186 = vunpack.c.l.s4 1983009808
    %v187 = vunpack.c.0.s8 %v186
    %v188 = vlaneseq
    %v189 = vshrl.u32 %v188, 7
    %v190 = vsub.s32 %v187, %v189
    %v191 = vrot.slane %v169, %v190
    %v193 = vunpack.c.l.s4 1983009808
    %v194 = vunpack.c.0.s8 %v193
    %v195 = vlaneseq
    %v196 = vshrl.u32 %v195, 7
    %v197 = vsub.s32 %v194, %v196
    %v198 = vrot.slane %v170, %v197
    %v199 = vcombine.low %v177, %v191
    %v200 = vcombine.high %v177, %v191
    %v201 = vcombine.low %v184, %v198
    %vm208 = vcmask 130048
    %v209 = vsel %vm208, %v201, 0
    %211 = vmatprep.subr.mxu0 0.0
    %212 = vmatpush1.msra.mxu0 %v25
    %213 = vmatprep.subr.mxu0 0.0
    %214 = vmatpush1.msra.mxu0 %v26
    %215 = vmatprep.subr.mxu0 0.0
    %216 = vmatpush1.msra.mxu0 %v27
    %217 = vmatprep.subr.mxu0 0.0
    %218 = vmatpush1.msra.mxu0 %v28
    %219 = vmatprep.subr.mxu0 0.0
    %220 = vmatpush1.msra.mxu0 %v29
    %221 = vmatprep.subr.mxu0 0.0
    %222 = vmatpush1.msra.mxu0 %v30
    %223 = vmatprep.subr.mxu0 0.0
    %224 = vmatpush1.msra.mxu0 %v31
    %225 = vmatprep.subr.mxu0 0.0
    %226 = vmatpush1.msra.mxu0 %v32
    %227 = vmatprep.subr.mxu0 0.0
    %228 = vmatpush1.msra.mxu0 %v33
    %229 = vmatprep.subr.mxu0 0.0
    %230 = vmatpush1.msra.mxu0 %v34
    %231 = vmatprep.subr.mxu0 0.0
    %232 = vmatpush1.msra.mxu0 %v35
    %233 = vmatprep.subr.mxu0 0.0
    %234 = vmatpush1.msra.mxu0 %v36
    %235 = vmatprep.subr.mxu0 0.0
    %236 = vmatpush1.msra.mxu0 %v37
    %237 = vmatprep.subr.mxu0 0.0
    %238 = vmatpush1.msra.mxu0 %v38
    %239 = vmatprep.subr.mxu0 0.0
    %240 = vmatpush1.msra.mxu0 %v39
    %241 = vmatprep.subr.mxu0 0.0
    %242 = vmatpush1.msra.mxu0 %v40
    %243 = vmatprep.subr.mxu0 0.0
    %244 = vmatpush1.msra.mxu0 %v41
    %245 = vmatprep.subr.mxu0 0.0
    %246 = vmatpush1.msra.mxu0 %v42
    %247 = vmatprep.subr.mxu0 0.0
    %248 = vmatpush1.msra.mxu0 %v43
    %249 = vmatprep.subr.mxu0 0.0
    %250 = vmatpush1.msra.mxu0 %v44
    %251 = vmatprep.subr.mxu0 0.0
    %252 = vmatpush1.msra.mxu0 %v45
    %253 = vmatprep.subr.mxu0 0.0
    %254 = vmatpush1.msra.mxu0 %v46
    %255 = vmatprep.subr.mxu0 0.0
    %256 = vmatpush1.msra.mxu0 %v47
    %257 = vmatprep.subr.mxu0 0.0
    %258 = vmatpush1.msra.mxu0 %v48
    %259 = vmatprep.subr.mxu0 0.0
    %260 = vmatpush1.msra.mxu0 %v49
    %261 = vmatprep.subr.mxu0 0.0
    %262 = vmatpush1.msra.mxu0 %v50
    %263 = vmatprep.subr.mxu0 0.0
    %264 = vmatpush1.msra.mxu0 %v51
    %265 = vmatprep.subr.mxu0 0.0
    %266 = vmatpush1.msra.mxu0 %v52
    %267 = vmatprep.subr.mxu0 0.0
    %268 = vmatpush1.msra.mxu0 %v53
    %269 = vmatprep.subr.mxu0 0.0
    %270 = vmatpush1.msra.mxu0 %v54
    %271 = vmatprep.subr.mxu0 0.0
    %272 = vmatpush1.msra.mxu0 %v55
    %273 = vmatprep.subr.mxu0 0.0
    %274 = vmatpush1.msra.mxu0 %v56
    %275 = vmatprep.mubr.f32.mxu0 %v164
    %276 = vmatmul.mubr.f32.gmra.mrb[0].mxu0 %v163
    %v277 = vpop.f32.mrb[0].mxu0
    %v278 = vadd.f32 0.0, %v277
    %v279 = vpop.f32.mrb[0].mxu0
    %280 = vdwg.mxu0
    %281 = vmatprep.subr.mxu0 0.0
    %282 = vmatpush1.msra.mxu0 %v57
    %283 = vmatprep.subr.mxu0 0.0
    %284 = vmatpush1.msra.mxu0 %v58
    %285 = vmatprep.subr.mxu0 0.0
    %286 = vmatpush1.msra.mxu0 %v59
    %287 = vmatprep.subr.mxu0 0.0
    %288 = vmatpush1.msra.mxu0 %v60
    %289 = vmatprep.subr.mxu0 0.0
    %290 = vmatpush1.msra.mxu0 %v61
    %291 = vmatprep.subr.mxu0 0.0
    %292 = vmatpush1.msra.mxu0 %v62
    %293 = vmatprep.subr.mxu0 0.0
    %294 = vmatpush1.msra.mxu0 %v63
    %295 = vmatprep.subr.mxu0 0.0
    %296 = vmatpush1.msra.mxu0 %v64
    %297 = vmatprep.subr.mxu0 0.0
    %298 = vmatpush1.msra.mxu0 %v65
    %299 = vmatprep.subr.mxu0 0.0
    %300 = vmatpush1.msra.mxu0 %v66
    %301 = vmatprep.subr.mxu0 0.0
    %302 = vmatpush1.msra.mxu0 %v67
    %303 = vmatprep.subr.mxu0 0.0
    %304 = vmatpush1.msra.mxu0 %v68
    %305 = vmatprep.subr.mxu0 0.0
    %306 = vmatpush1.msra.mxu0 %v69
    %307 = vmatprep.subr.mxu0 0.0
    %308 = vmatpush1.msra.mxu0 %v70
    %309 = vmatprep.subr.mxu0 0.0
    %310 = vmatpush1.msra.mxu0 %v71
    %311 = vmatprep.subr.mxu0 0.0
    %312 = vmatpush1.msra.mxu0 %v72
    %313 = vmatprep.subr.mxu0 0.0
    %314 = vmatpush1.msra.mxu0 %v73
    %315 = vmatprep.subr.mxu0 0.0
    %316 = vmatpush1.msra.mxu0 %v74
    %317 = vmatprep.subr.mxu0 0.0
    %318 = vmatpush1.msra.mxu0 %v75
    %319 = vmatprep.subr.mxu0 0.0
    %320 = vmatpush1.msra.mxu0 %v76
    %321 = vmatprep.subr.mxu0 0.0
    %322 = vmatpush1.msra.mxu0 %v77
    %323 = vmatprep.subr.mxu0 0.0
    %324 = vmatpush1.msra.mxu0 %v78
    %325 = vmatprep.subr.mxu0 0.0
    %326 = vmatpush1.msra.mxu0 %v79
    %327 = vmatprep.subr.mxu0 0.0
    %328 = vmatpush1.msra.mxu0 %v80
    %329 = vmatprep.subr.mxu0 0.0
    %330 = vmatpush1.msra.mxu0 %v81
    %331 = vmatprep.subr.mxu0 0.0
    %332 = vmatpush1.msra.mxu0 %v82
    %333 = vmatprep.subr.mxu0 0.0
    %334 = vmatpush1.msra.mxu0 %v83
    %335 = vmatprep.subr.mxu0 0.0
    %336 = vmatpush1.msra.mxu0 %v84
    %337 = vmatprep.subr.mxu0 0.0
    %338 = vmatpush1.msra.mxu0 %v85
    %339 = vmatprep.subr.mxu0 0.0
    %340 = vmatpush1.msra.mxu0 %v86
    %341 = vmatprep.subr.mxu0 0.0
    %342 = vmatpush1.msra.mxu0 %v87
    %343 = vmatprep.subr.mxu0 0.0
    %344 = vmatpush1.msra.mxu0 %v88
    %345 = vmatprep.mubr.f32.mxu0 %v166
    %346 = vmatmul.mubr.f32.gmra.mrb[0].mxu0 %v165
    %v347 = vpop.f32.mrb[0].mxu0
    %v348 = vadd.f32 %v278, %v347
    %v349 = vpop.f32.mrb[0].mxu0
    %350 = vdwg.mxu0
    %351 = vmatprep.subr.mxu0 0.0
    %352 = vmatpush1.msra.mxu0 %v89
    %353 = vmatprep.subr.mxu0 0.0
    %354 = vmatpush1.msra.mxu0 %v90
    %355 = vmatprep.subr.mxu0 0.0
    %356 = vmatpush1.msra.mxu0 %v91
    %357 = vmatprep.subr.mxu0 0.0
    %358 = vmatpush1.msra.mxu0 %v92
    %359 = vmatprep.subr.mxu0 0.0
    %360 = vmatpush1.msra.mxu0 %v93
    %361 = vmatprep.subr.mxu0 0.0
    %362 = vmatpush1.msra.mxu0 %v94
    %363 = vmatprep.subr.mxu0 0.0
    %364 = vmatpush1.msra.mxu0 %v95
    %365 = vmatprep.subr.mxu0 0.0
    %366 = vmatpush1.msra.mxu0 %v96
    %367 = vmatprep.subr.mxu0 0.0
    %368 = vmatpush1.msra.mxu0 %v97
    %369 = vmatprep.subr.mxu0 0.0
    %370 = vmatpush1.msra.mxu0 %v98
    %371 = vmatprep.subr.mxu0 0.0
    %372 = vmatpush1.msra.mxu0 %v99
    %373 = vmatprep.subr.mxu0 0.0
    %374 = vmatpush1.msra.mxu0 %v100
    %375 = vmatprep.subr.mxu0 0.0
    %376 = vmatpush1.msra.mxu0 %v101
    %377 = vmatprep.subr.mxu0 0.0
    %378 = vmatpush1.msra.mxu0 %v102
    %379 = vmatprep.subr.mxu0 0.0
    %380 = vmatpush1.msra.mxu0 %v103
    %381 = vmatprep.subr.mxu0 0.0
    %382 = vmatpush1.msra.mxu0 %v104
    %383 = vmatprep.subr.mxu0 0.0
    %384 = vmatpush1.msra.mxu0 %v105
    %385 = vmatprep.subr.mxu0 0.0
    %386 = vmatpush1.msra.mxu0 %v106
    %387 = vmatprep.subr.mxu0 0.0
    %388 = vmatpush1.msra.mxu0 %v107
    %389 = vmatprep.subr.mxu0 0.0
    %390 = vmatpush1.msra.mxu0 %v108
    %391 = vmatprep.subr.mxu0 0.0
    %392 = vmatpush1.msra.mxu0 %v109
    %393 = vmatprep.subr.mxu0 0.0
    %394 = vmatpush1.msra.mxu0 %v110
    %395 = vmatprep.subr.mxu0 0.0
    %396 = vmatpush1.msra.mxu0 %v111
    %397 = vmatprep.subr.mxu0 0.0
    %398 = vmatpush1.msra.mxu0 %v112
    %399 = vmatprep.subr.mxu0 0.0
    %400 = vmatpush1.msra.mxu0 %v113
    %401 = vmatprep.subr.mxu0 0.0
    %402 = vmatpush1.msra.mxu0 %v114
    %403 = vmatprep.subr.mxu0 0.0
    %404 = vmatpush1.msra.mxu0 %v115
    %405 = vmatprep.subr.mxu0 0.0
    %406 = vmatpush1.msra.mxu0 %v116
    %407 = vmatprep.subr.mxu0 0.0
    %408 = vmatpush1.msra.mxu0 %v117
    %409 = vmatprep.subr.mxu0 0.0
    %410 = vmatpush1.msra.mxu0 %v118
    %411 = vmatprep.subr.mxu0 0.0
    %412 = vmatpush1.msra.mxu0 %v119
    %413 = vmatprep.subr.mxu0 0.0
    %414 = vmatpush1.msra.mxu0 %v120
    %415 = vmatprep.mubr.f32.mxu0 %v200
    %416 = vmatmul.mubr.f32.gmra.mrb[0].mxu0 %v199
    %v417 = vpop.f32.mrb[0].mxu0
    %v418 = vadd.f32 %v348, %v417
    %v419 = vpop.f32.mrb[0].mxu0
    %420 = vdwg.mxu0
    %421 = vmatprep.subr.mxu0 0.0
    %422 = vmatpush1.msra.mxu0 %v121
    %423 = vmatprep.subr.mxu0 0.0
    %424 = vmatpush1.msra.mxu0 %v122
    %425 = vmatprep.subr.mxu0 0.0
    %426 = vmatpush1.msra.mxu0 0.0
    %427 = vmatprep.subr.mxu0 0.0
    %428 = vmatpush1.msra.mxu0 0.0
    %429 = vmatprep.subr.mxu0 0.0
    %430 = vmatpush1.msra.mxu0 0.0
    %431 = vmatprep.subr.mxu0 0.0
    %432 = vmatpush1.msra.mxu0 0.0
    %433 = vmatprep.subr.mxu0 0.0
    %434 = vmatpush1.msra.mxu0 0.0
    %435 = vmatprep.subr.mxu0 0.0
    %436 = vmatpush1.msra.mxu0 0.0
    %437 = vmatprep.subr.mxu0 0.0
    %438 = vmatpush1.msra.mxu0 0.0
    %439 = vmatprep.subr.mxu0 0.0
    %440 = vmatpush1.msra.mxu0 0.0
    %441 = vmatprep.subr.mxu0 0.0
    %442 = vmatpush1.msra.mxu0 0.0
    %443 = vmatprep.subr.mxu0 0.0
    %444 = vmatpush1.msra.mxu0 0.0
    %445 = vmatprep.subr.mxu0 0.0
    %446 = vmatpush1.msra.mxu0 0.0
    %447 = vmatprep.subr.mxu0 0.0
    %448 = vmatpush1.msra.mxu0 0.0
    %449 = vmatprep.subr.mxu0 0.0
    %450 = vmatpush1.msra.mxu0 0.0
    %451 = vmatprep.subr.mxu0 0.0
    %452 = vmatpush1.msra.mxu0 0.0
    %453 = vmatprep.subr.mxu0 0.0
    %454 = vmatpush1.msra.mxu0 0.0
    %455 = vmatprep.subr.mxu0 0.0
    %456 = vmatpush1.msra.mxu0 0.0
    %457 = vmatprep.subr.mxu0 0.0
    %458 = vmatpush1.msra.mxu0 0.0
    %459 = vmatprep.subr.mxu0 0.0
    %460 = vmatpush1.msra.mxu0 0.0
    %461 = vmatprep.subr.mxu0 0.0
    %462 = vmatpush1.msra.mxu0 0.0
    %463 = vmatprep.subr.mxu0 0.0
    %464 = vmatpush1.msra.mxu0 0.0
    %465 = vmatprep.subr.mxu0 0.0
    %466 = vmatpush1.msra.mxu0 0.0
    %467 = vmatprep.subr.mxu0 0.0
    %468 = vmatpush1.msra.mxu0 0.0
    %469 = vmatprep.subr.mxu0 0.0
    %470 = vmatpush1.msra.mxu0 0.0
    %471 = vmatprep.subr.mxu0 0.0
    %472 = vmatpush1.msra.mxu0 0.0
    %473 = vmatprep.subr.mxu0 0.0
    %474 = vmatpush1.msra.mxu0 0.0
    %475 = vmatprep.subr.mxu0 0.0
    %476 = vmatpush1.msra.mxu0 0.0
    %477 = vmatprep.subr.mxu0 0.0
    %478 = vmatpush1.msra.mxu0 0.0
    %479 = vmatprep.subr.mxu0 0.0
    %480 = vmatpush1.msra.mxu0 0.0
    %481 = vmatprep.subr.mxu0 0.0
    %482 = vmatpush1.msra.mxu0 0.0
    %483 = vmatprep.subr.mxu0 0.0
    %484 = vmatpush1.msra.mxu0 0.0
    %485 = vmatprep.mubr.f32.mxu0 0.0
    %486 = vmatmul.mubr.f32.gmra.mrb[0].mxu0 %v209
    %v487 = vpop.f32.mrb[0].mxu0
    %v488 = vadd.f32 %v418, %v487
    %v489 = vpop.f32.mrb[0].mxu0
    %490 = vdwg.mxu0
    %v491 = vld [vmem:[%s2] sm:$0xff]
    %v492 = vld [vmem:[%s2 + $0x8] sm:$0xff]
    %v493 = vld [vmem:[%s2 + $0x10] sm:$0xff]
    %v494 = vld [vmem:[%s2 + $0x18] sm:$0xff]
    %v495 = vld [vmem:[%s2 + $0x20] sm:$0xff]
    %v496 = vld [vmem:[%s2 + $0x28] sm:$0xff]
    %v497 = vld [vmem:[%s2 + $0x30] sm:$0xff]
    %v498 = vld [vmem:[%s2 + $0x38] sm:$0xff]
    %v499 = vld [vmem:[%s2 + $0x40] sm:$0xff]
    %v500 = vld [vmem:[%s2 + $0x48] sm:$0xff]
    %v501 = vld [vmem:[%s2 + $0x50] sm:$0xff]
    %v502 = vld [vmem:[%s2 + $0x58] sm:$0xff]
    %v503 = vld [vmem:[%s2 + $0x60] sm:$0xff]
    %v504 = vld [vmem:[%s2 + $0x68] sm:$0xff]
    %v505 = vld [vmem:[%s2 + $0x70] sm:$0xff]
    %v506 = vld [vmem:[%s2 + $0x78] sm:$0xff]
    %v507 = vld [vmem:[%s2 + $0x80] sm:$0xff]
    %v508 = vld [vmem:[%s2 + $0x88] sm:$0xff]
    %v509 = vld [vmem:[%s2 + $0x90] sm:$0xff]
    %v510 = vld [vmem:[%s2 + $0x98] sm:$0xff]
    %v511 = vld [vmem:[%s2 + $0xa0] sm:$0xff]
    %v512 = vld [vmem:[%s2 + $0xa8] sm:$0xff]
    %v513 = vld [vmem:[%s2 + $0xb0] sm:$0xff]
    %v514 = vld [vmem:[%s2 + $0xb8] sm:$0xff]
    %v515 = vld [vmem:[%s2 + $0xc0] sm:$0xff]
    %v516 = vld [vmem:[%s2 + $0xc8] sm:$0xff]
    %v517 = vld [vmem:[%s2 + $0xd0] sm:$0xff]
    %v518 = vld [vmem:[%s2 + $0xd8] sm:$0xff]
    %v519 = vld [vmem:[%s3] sm:$0x7f]
    %v521 = vlaneseq
    %v522 = vshrl.u32 %v521, 7
    %v523 = vsub.s32 0, %v522
    %v524 = vrot.slane %v519, %v523
    %v525 = vlaneseq
    %v526 = vshrl.u32 %v525, 7
    %v527 = vsub.s32 1, %v526
    %v528 = vrot.slane %v519, %v527
    %v529 = vlaneseq
    %v530 = vshrl.u32 %v529, 7
    %v531 = vsub.s32 2, %v530
    %v532 = vrot.slane %v519, %v531
    %v533 = vlaneseq
    %v534 = vshrl.u32 %v533, 7
    %v535 = vsub.s32 3, %v534
    %v536 = vrot.slane %v519, %v535
    %v537 = vlaneseq
    %v538 = vshrl.u32 %v537, 7
    %v539 = vsub.s32 4, %v538
    %v540 = vrot.slane %v519, %v539
    %v541 = vlaneseq
    %v542 = vshrl.u32 %v541, 7
    %v543 = vsub.s32 5, %v542
    %v544 = vrot.slane %v519, %v543
    %v545 = vlaneseq
    %v546 = vshrl.u32 %v545, 7
    %v547 = vsub.s32 6, %v546
    %v548 = vrot.slane %v519, %v547
    %vm556 = vcmask 261120
    %v558 = vsel %vm556, %v488, 0
    %560 = vmatprep.subr.mxu0 %v492
    %561 = vmatpush1.msra.mxu0 %v491
    %562 = vmatprep.subr.mxu0 %v499
    %563 = vmatpush1.msra.mxu0 %v498
    %564 = vmatprep.subr.mxu0 %v506
    %565 = vmatpush1.msra.mxu0 %v505
    %566 = vmatprep.subr.mxu0 %v513
    %567 = vmatpush1.msra.mxu0 %v512
    %568 = vmatprep.subr.mxu0 0.0
    %569 = vmatpush1.msra.mxu0 0.0
    %570 = vmatprep.subr.mxu0 0.0
    %571 = vmatpush1.msra.mxu0 0.0
    %572 = vmatprep.subr.mxu0 0.0
    %573 = vmatpush1.msra.mxu0 0.0
    %574 = vmatprep.subr.mxu0 0.0
    %575 = vmatpush1.msra.mxu0 0.0
    %576 = vmatprep.subr.mxu0 0.0
    %577 = vmatpush1.msra.mxu0 0.0
    %578 = vmatprep.subr.mxu0 0.0
    %579 = vmatpush1.msra.mxu0 0.0
    %580 = vmatprep.subr.mxu0 0.0
    %581 = vmatpush1.msra.mxu0 0.0
    %582 = vmatprep.subr.mxu0 0.0
    %583 = vmatpush1.msra.mxu0 0.0
    %584 = vmatprep.subr.mxu0 0.0
    %585 = vmatpush1.msra.mxu0 0.0
    %586 = vmatprep.subr.mxu0 0.0
    %587 = vmatpush1.msra.mxu0 0.0
    %588 = vmatprep.subr.mxu0 0.0
    %589 = vmatpush1.msra.mxu0 0.0
    %590 = vmatprep.subr.mxu0 0.0
    %591 = vmatpush1.msra.mxu0 0.0
    %592 = vmatprep.subr.mxu0 0.0
    %593 = vmatpush1.msra.mxu0 0.0
    %594 = vmatprep.subr.mxu0 0.0
    %595 = vmatpush1.msra.mxu0 0.0
    %596 = vmatprep.subr.mxu0 0.0
    %597 = vmatpush1.msra.mxu0 0.0
    %598 = vmatprep.subr.mxu0 0.0
    %599 = vmatpush1.msra.mxu0 0.0
    %600 = vmatprep.subr.mxu0 0.0
    %601 = vmatpush1.msra.mxu0 0.0
    %602 = vmatprep.subr.mxu0 0.0
    %603 = vmatpush1.msra.mxu0 0.0
    %604 = vmatprep.subr.mxu0 0.0
    %605 = vmatpush1.msra.mxu0 0.0
    %606 = vmatprep.subr.mxu0 0.0
    %607 = vmatpush1.msra.mxu0 0.0
    %608 = vmatprep.subr.mxu0 0.0
    %609 = vmatpush1.msra.mxu0 0.0
    %610 = vmatprep.subr.mxu0 0.0
    %611 = vmatpush1.msra.mxu0 0.0
    %612 = vmatprep.subr.mxu0 0.0
    %613 = vmatpush1.msra.mxu0 0.0
    %614 = vmatprep.subr.mxu0 0.0
    %615 = vmatpush1.msra.mxu0 0.0
    %616 = vmatprep.subr.mxu0 0.0
    %617 = vmatpush1.msra.mxu0 0.0
    %618 = vmatprep.subr.mxu0 0.0
    %619 = vmatpush1.msra.mxu0 0.0
    %620 = vmatprep.subr.mxu0 0.0
    %621 = vmatpush1.msra.mxu0 0.0
    %622 = vmatprep.subr.mxu0 0.0
    %623 = vmatpush1.msra.mxu0 0.0
    %624 = vmatprep.mubr.f32.mxu0 0.0
    %625 = vmatmul.mubr.f32.gmra.mrb[0].mxu0 %v558
    %v626 = vpop.f32.mrb[0].mxu0
    %v627 = vadd.f32 %v524, %v626
    %v628 = vpop.f32.mrb[0].mxu0
    %v629 = vadd.f32 %v528, %v628
    %630 = vdwg.mxu0
    %631 = vmatprep.subr.mxu0 %v494
    %632 = vmatpush1.msra.mxu0 %v493
    %633 = vmatprep.subr.mxu0 %v501
    %634 = vmatpush1.msra.mxu0 %v500
    %635 = vmatprep.subr.mxu0 %v508
    %636 = vmatpush1.msra.mxu0 %v507
    %637 = vmatprep.subr.mxu0 %v515
    %638 = vmatpush1.msra.mxu0 %v514
    %639 = vmatprep.subr.mxu0 0.0
    %640 = vmatpush1.msra.mxu0 0.0
    %641 = vmatprep.subr.mxu0 0.0
    %642 = vmatpush1.msra.mxu0 0.0
    %643 = vmatprep.subr.mxu0 0.0
    %644 = vmatpush1.msra.mxu0 0.0
    %645 = vmatprep.subr.mxu0 0.0
    %646 = vmatpush1.msra.mxu0 0.0
    %647 = vmatprep.subr.mxu0 0.0
    %648 = vmatpush1.msra.mxu0 0.0
    %649 = vmatprep.subr.mxu0 0.0
    %650 = vmatpush1.msra.mxu0 0.0
    %651 = vmatprep.subr.mxu0 0.0
    %652 = vmatpush1.msra.mxu0 0.0
    %653 = vmatprep.subr.mxu0 0.0
    %654 = vmatpush1.msra.mxu0 0.0
    %655 = vmatprep.subr.mxu0 0.0
    %656 = vmatpush1.msra.mxu0 0.0
    %657 = vmatprep.subr.mxu0 0.0
    %658 = vmatpush1.msra.mxu0 0.0
    %659 = vmatprep.subr.mxu0 0.0
    %660 = vmatpush1.msra.mxu0 0.0
    %661 = vmatprep.subr.mxu0 0.0
    %662 = vmatpush1.msra.mxu0 0.0
    %663 = vmatprep.subr.mxu0 0.0
    %664 = vmatpush1.msra.mxu0 0.0
    %665 = vmatprep.subr.mxu0 0.0
    %666 = vmatpush1.msra.mxu0 0.0
    %667 = vmatprep.subr.mxu0 0.0
    %668 = vmatpush1.msra.mxu0 0.0
    %669 = vmatprep.subr.mxu0 0.0
    %670 = vmatpush1.msra.mxu0 0.0
    %671 = vmatprep.subr.mxu0 0.0
    %672 = vmatpush1.msra.mxu0 0.0
    %673 = vmatprep.subr.mxu0 0.0
    %674 = vmatpush1.msra.mxu0 0.0
    %675 = vmatprep.subr.mxu0 0.0
    %676 = vmatpush1.msra.mxu0 0.0
    %677 = vmatprep.subr.mxu0 0.0
    %678 = vmatpush1.msra.mxu0 0.0
    %679 = vmatprep.subr.mxu0 0.0
    %680 = vmatpush1.msra.mxu0 0.0
    %681 = vmatprep.subr.mxu0 0.0
    %682 = vmatpush1.msra.mxu0 0.0
    %683 = vmatprep.subr.mxu0 0.0
    %684 = vmatpush1.msra.mxu0 0.0
    %685 = vmatprep.subr.mxu0 0.0
    %686 = vmatpush1.msra.mxu0 0.0
    %687 = vmatprep.subr.mxu0 0.0
    %688 = vmatpush1.msra.mxu0 0.0
    %689 = vmatprep.subr.mxu0 0.0
    %690 = vmatpush1.msra.mxu0 0.0
    %691 = vmatprep.subr.mxu0 0.0
    %692 = vmatpush1.msra.mxu0 0.0
    %693 = vmatprep.subr.mxu0 0.0
    %694 = vmatpush1.msra.mxu0 0.0
    %695 = vmatprep.mubr.f32.mxu0 0.0
    %696 = vmatmul.mubr.f32.gmra.mrb[0].mxu0 %v558
    %v697 = vpop.f32.mrb[0].mxu0
    %v698 = vadd.f32 %v532, %v697
    %v699 = vpop.f32.mrb[0].mxu0
    %v700 = vadd.f32 %v536, %v699
    %701 = vdwg.mxu0
    %702 = vmatprep.subr.mxu0 %v496
    %703 = vmatpush1.msra.mxu0 %v495
    %704 = vmatprep.subr.mxu0 %v503
    %705 = vmatpush1.msra.mxu0 %v502
    %706 = vmatprep.subr.mxu0 %v510
    %707 = vmatpush1.msra.mxu0 %v509
    %708 = vmatprep.subr.mxu0 %v517
    %709 = vmatpush1.msra.mxu0 %v516
    %710 = vmatprep.subr.mxu0 0.0
    %711 = vmatpush1.msra.mxu0 0.0
    %712 = vmatprep.subr.mxu0 0.0
    %713 = vmatpush1.msra.mxu0 0.0
    %714 = vmatprep.subr.mxu0 0.0
    %715 = vmatpush1.msra.mxu0 0.0
    %716 = vmatprep.subr.mxu0 0.0
    %717 = vmatpush1.msra.mxu0 0.0
    %718 = vmatprep.subr.mxu0 0.0
    %719 = vmatpush1.msra.mxu0 0.0
    %720 = vmatprep.subr.mxu0 0.0
    %721 = vmatpush1.msra.mxu0 0.0
    %722 = vmatprep.subr.mxu0 0.0
    %723 = vmatpush1.msra.mxu0 0.0
    %724 = vmatprep.subr.mxu0 0.0
    %725 = vmatpush1.msra.mxu0 0.0
    %726 = vmatprep.subr.mxu0 0.0
    %727 = vmatpush1.msra.mxu0 0.0
    %728 = vmatprep.subr.mxu0 0.0
    %729 = vmatpush1.msra.mxu0 0.0
    %730 = vmatprep.subr.mxu0 0.0
    %731 = vmatpush1.msra.mxu0 0.0
    %732 = vmatprep.subr.mxu0 0.0
    %733 = vmatpush1.msra.mxu0 0.0
    %734 = vmatprep.subr.mxu0 0.0
    %735 = vmatpush1.msra.mxu0 0.0
    %736 = vmatprep.subr.mxu0 0.0
    %737 = vmatpush1.msra.mxu0 0.0
    %738 = vmatprep.subr.mxu0 0.0
    %739 = vmatpush1.msra.mxu0 0.0
    %740 = vmatprep.subr.mxu0 0.0
    %741 = vmatpush1.msra.mxu0 0.0
    %742 = vmatprep.subr.mxu0 0.0
    %743 = vmatpush1.msra.mxu0 0.0
    %744 = vmatprep.subr.mxu0 0.0
    %745 = vmatpush1.msra.mxu0 0.0
    %746 = vmatprep.subr.mxu0 0.0
    %747 = vmatpush1.msra.mxu0 0.0
    %748 = vmatprep.subr.mxu0 0.0
    %749 = vmatpush1.msra.mxu0 0.0
    %750 = vmatprep.subr.mxu0 0.0
    %751 = vmatpush1.msra.mxu0 0.0
    %752 = vmatprep.subr.mxu0 0.0
    %753 = vmatpush1.msra.mxu0 0.0
    %754 = vmatprep.subr.mxu0 0.0
    %755 = vmatpush1.msra.mxu0 0.0
    %756 = vmatprep.subr.mxu0 0.0
    %757 = vmatpush1.msra.mxu0 0.0
    %758 = vmatprep.subr.mxu0 0.0
    %759 = vmatpush1.msra.mxu0 0.0
    %760 = vmatprep.subr.mxu0 0.0
    %761 = vmatpush1.msra.mxu0 0.0
    %762 = vmatprep.subr.mxu0 0.0
    %763 = vmatpush1.msra.mxu0 0.0
    %764 = vmatprep.subr.mxu0 0.0
    %765 = vmatpush1.msra.mxu0 0.0
    %766 = vmatprep.mubr.f32.mxu0 0.0
    %767 = vmatmul.mubr.f32.gmra.mrb[0].mxu0 %v558
    %v768 = vpop.f32.mrb[0].mxu0
    %v769 = vadd.f32 %v540, %v768
    %v770 = vpop.f32.mrb[0].mxu0
    %v771 = vadd.f32 %v544, %v770
    %772 = vdwg.mxu0
    %773 = vmatprep.subr.mxu0 0.0
    %774 = vmatpush1.msra.mxu0 %v497
    %775 = vmatprep.subr.mxu0 0.0
    %776 = vmatpush1.msra.mxu0 %v504
    %777 = vmatprep.subr.mxu0 0.0
    %778 = vmatpush1.msra.mxu0 %v511
    %779 = vmatprep.subr.mxu0 0.0
    %780 = vmatpush1.msra.mxu0 %v518
    %781 = vmatprep.subr.mxu0 0.0
    %782 = vmatpush1.msra.mxu0 0.0
    %783 = vmatprep.subr.mxu0 0.0
    %784 = vmatpush1.msra.mxu0 0.0
    %785 = vmatprep.subr.mxu0 0.0
    %786 = vmatpush1.msra.mxu0 0.0
    %787 = vmatprep.subr.mxu0 0.0
    %788 = vmatpush1.msra.mxu0 0.0
    %789 = vmatprep.subr.mxu0 0.0
    %790 = vmatpush1.msra.mxu0 0.0
    %791 = vmatprep.subr.mxu0 0.0
    %792 = vmatpush1.msra.mxu0 0.0
    %793 = vmatprep.subr.mxu0 0.0
    %794 = vmatpush1.msra.mxu0 0.0
    %795 = vmatprep.subr.mxu0 0.0
    %796 = vmatpush1.msra.mxu0 0.0
    %797 = vmatprep.subr.mxu0 0.0
    %798 = vmatpush1.msra.mxu0 0.0
    %799 = vmatprep.subr.mxu0 0.0
    %800 = vmatpush1.msra.mxu0 0.0
    %801 = vmatprep.subr.mxu0 0.0
    %802 = vmatpush1.msra.mxu0 0.0
    %803 = vmatprep.subr.mxu0 0.0
    %804 = vmatpush1.msra.mxu0 0.0
    %805 = vmatprep.subr.mxu0 0.0
    %806 = vmatpush1.msra.mxu0 0.0
    %807 = vmatprep.subr.mxu0 0.0
    %808 = vmatpush1.msra.mxu0 0.0
    %809 = vmatprep.subr.mxu0 0.0
    %810 = vmatpush1.msra.mxu0 0.0
    %811 = vmatprep.subr.mxu0 0.0
    %812 = vmatpush1.msra.mxu0 0.0
    %813 = vmatprep.subr.mxu0 0.0
    %814 = vmatpush1.msra.mxu0 0.0
    %815 = vmatprep.subr.mxu0 0.0
    %816 = vmatpush1.msra.mxu0 0.0
    %817 = vmatprep.subr.mxu0 0.0
    %818 = vmatpush1.msra.mxu0 0.0
    %819 = vmatprep.subr.mxu0 0.0
    %820 = vmatpush1.msra.mxu0 0.0
    %821 = vmatprep.subr.mxu0 0.0
    %822 = vmatpush1.msra.mxu0 0.0
    %823 = vmatprep.subr.mxu0 0.0
    %824 = vmatpush1.msra.mxu0 0.0
    %825 = vmatprep.subr.mxu0 0.0
    %826 = vmatpush1.msra.mxu0 0.0
    %827 = vmatprep.subr.mxu0 0.0
    %828 = vmatpush1.msra.mxu0 0.0
    %829 = vmatprep.subr.mxu0 0.0
    %830 = vmatpush1.msra.mxu0 0.0
    %831 = vmatprep.subr.mxu0 0.0
    %832 = vmatpush1.msra.mxu0 0.0
    %833 = vmatprep.subr.mxu0 0.0
    %834 = vmatpush1.msra.mxu0 0.0
    %835 = vmatprep.subr.mxu0 0.0
    %836 = vmatpush1.msra.mxu0 0.0
    %837 = vmatprep.mubr.f32.mxu0 0.0
    %838 = vmatmul.mubr.f32.gmra.mrb[0].mxu0 %v558
    %v839 = vpop.f32.mrb[0].mxu0
    %v840 = vadd.f32 %v548, %v839
    %v841 = vpop.f32.mrb[0].mxu0
    %842 = vdwg.mxu0
    %v850 = vcombine.low %v627, %v629
    %v851 = vcombine.high %v627, %v629
    %v852 = vcombine.low %v698, %v700
    %v853 = vcombine.high %v698, %v700
    %v855 = vunpack.c.l.s4 1983009808
    %v856 = vunpack.c.0.s8 %v855
    %v857 = vlaneseq
    %v858 = vshrl.u32 %v857, 7
    %v859 = vsub.s32 %v856, %v858
    %v860 = vrot.slane %v850, %v859
    %v862 = vunpack.c.l.s4 1983009808
    %v863 = vunpack.c.0.s8 %v862
    %v864 = vlaneseq
    %v865 = vshrl.u32 %v864, 7
    %v866 = vsub.s32 %v863, %v865
    %v867 = vrot.slane %v851, %v866
    %v869 = vunpack.c.l.s4 1983009808
    %v870 = vunpack.c.0.s8 %v869
    %v871 = vlaneseq
    %v872 = vshrl.u32 %v871, 7
    %v873 = vsub.s32 %v870, %v872
    %v874 = vrot.slane %v852, %v873
    %v876 = vunpack.c.l.s4 1983009808
    %v877 = vunpack.c.0.s8 %v876
    %v878 = vlaneseq
    %v879 = vshrl.u32 %v878, 7
    %v880 = vsub.s32 %v877, %v879
    %v881 = vrot.slane %v853, %v880
    %v882 = vcombine.low %v860, %v874
    %v883 = vcombine.high %v860, %v874
    %v884 = vcombine.low %v867, %v881
    %v885 = vcombine.high %v867, %v881
    %v886 = vcombine.low %v769, %v771
    %v887 = vcombine.high %v769, %v771
    %v888 = vcombine.high %v840, %v840
    %v890 = vunpack.c.l.s4 1983009808
    %v891 = vunpack.c.0.s8 %v890
    %v892 = vlaneseq
    %v893 = vshrl.u32 %v892, 7
    %v894 = vsub.s32 %v891, %v893
    %v895 = vrot.slane %v886, %v894
    %v897 = vunpack.c.l.s4 1983009808
    %v898 = vunpack.c.0.s8 %v897
    %v899 = vlaneseq
    %v900 = vshrl.u32 %v899, 7
    %v901 = vsub.s32 %v898, %v900
    %v902 = vrot.slane %v887, %v901
    %v904 = vunpack.c.l.s4 1983009808
    %v905 = vunpack.c.0.s8 %v904
    %v906 = vlaneseq
    %v907 = vshrl.u32 %v906, 7
    %v908 = vsub.s32 %v905, %v907
    %v909 = vrot.slane %v840, %v908
    %v911 = vunpack.c.l.s4 1983009808
    %v912 = vunpack.c.0.s8 %v911
    %v913 = vlaneseq
    %v914 = vshrl.u32 %v913, 7
    %v915 = vsub.s32 %v912, %v914
    %v916 = vrot.slane %v888, %v915
    %v917 = vcombine.low %v895, %v909
    %v918 = vcombine.high %v895, %v909
    %v919 = vcombine.low %v902, %v916
    %v920 = vcombine.high %v902, %v916
    %929 = vst [vmem:[#allocation2] sm:$0xff] %v882
    %vm930 = vcmask 1041408
    %vm931 = vcmask 1043458
    %vm932 = vmor %vm931, %vm930
    %vm933 = vcmask 128004
    %vm934 = vmor %vm933, %vm932
    %935 = vst.msk [vmem:[#allocation2 + $0x8] sm:$0x3f] %vm934, %v917
    %936 = vst [vmem:[#allocation2 + $0xe] sm:$0xff] %v883
    %937 = vst.msk [vmem:[#allocation2 + $0x16] sm:$0x3f] %vm934, %v918
    %938 = vst [vmem:[#allocation2 + $0x1c] sm:$0xff] %v884
    %939 = vst.msk [vmem:[#allocation2 + $0x24] sm:$0x3f] %vm934, %v919
    %940 = vst [vmem:[#allocation2 + $0x2a] sm:$0xff] %v885
    %941 = vst.msk [vmem:[#allocation2 + $0x32] sm:$0x3f] %vm934, %v920
    // Predicated region
    $region18: #{linear_ae_lc_forward.1} parent=1 // pred_check
      _
    $region19: #{linear_ae_lc_forward.1} parent=1 // pred_check_branch
      %943 = sbr.rel (0) target = $region21
    $region20: #{linear_ae_lc_forward.1} parent=1 // pred_region
      // Predicated region
      $region22: #{linear_ae_lc_forward.1} parent=20 // pred_check
        _
      $region23: #{linear_ae_lc_forward.1} parent=20 // pred_check_branch
        %945 = sbr.rel (0) target = $region25
      $region24: #{linear_ae_lc_forward.1} parent=20 // pred_region
        // Predicated region
        $region26: #{linear_ae_lc_forward.1} parent=24 // pred_check
          _
        $region27: #{linear_ae_lc_forward.1} parent=24 // pred_check_branch
          %947 = sbr.rel (0) target = $region29
        $region28: #{linear_ae_lc_forward.1} parent=24 // pred_region
          %s948 = scalar_lea.vmem [#allocation2], 8
          %s949 = scalar_lea.vmem %s4, 8
          loop: start=0, step=1, limit=1
          $region30: #{linear_ae_lc_forward.1} parent=28 // loop_pre_header
            _
          $region31: #{linear_ae_lc_forward.1} parent=28 // loop_header
            %s951 = sphi 0, %s955
            %p952 = scmp.ge.s32.totalorder %s951, 1
            %s956 = sphi [#allocation2], [#allocation2]
            %s957 = sphi %s4, %s4
          $region32: #{linear_ae_lc_forward.1} parent=28 // loop_header_branch
            %954 = sbr.rel (%p952) target = $region36
          $region33: #{linear_ae_lc_forward.1} parent=28 // loop_body
            %v958 = vld [vmem:[%s956] sm:$0xff]
            %959 = vst [vmem:[%s957] sm:$0xff] %v958
          $region34: #{linear_ae_lc_forward.1} parent=28 // loop_footer
            %s955 = sadd.s32 1, %s951
          $region35: #{linear_ae_lc_forward.1} parent=28 // loop_footer_branch
            %950 = sbr.rel target = $region31
          $region36: #{linear_ae_lc_forward.1} parent=28 // loop_exit
            _
          loop: start=0, step=1, limit=1
          $region37: #{linear_ae_lc_forward.1} parent=28 // loop_pre_header
            _
          $region38: #{linear_ae_lc_forward.1} parent=28 // loop_header
            %s962 = sphi 0, %s966
            %p963 = scmp.ge.s32.totalorder %s962, 1
            %s967 = sphi %s948, %s948
            %s968 = sphi %s949, %s949
          $region39: #{linear_ae_lc_forward.1} parent=28 // loop_header_branch
            %965 = sbr.rel (%p963) target = $region43
          $region40: #{linear_ae_lc_forward.1} parent=28 // loop_body
            %v969 = vld [vmem:[%s967] sm:$0x3f]
            %970 = vst [vmem:[%s968] sm:$0x3f] %v969
          $region41: #{linear_ae_lc_forward.1} parent=28 // loop_footer
            %s966 = sadd.s32 1, %s962
          $region42: #{linear_ae_lc_forward.1} parent=28 // loop_footer_branch
            %961 = sbr.rel target = $region38
          $region43: #{linear_ae_lc_forward.1} parent=28 // loop_exit
            _
        $region29: #{linear_ae_lc_forward.1} parent=24 // pred_fallthru
          _
      $region25: #{linear_ae_lc_forward.1} parent=20 // pred_fallthru
        _
      %971 = vnop
    $region21: #{linear_ae_lc_forward.1} parent=1 // pred_fallthru
      _
    // Predicated region
    $region44: #{linear_ae_lc_forward.1} parent=1 // pred_check
      _
    $region45: #{linear_ae_lc_forward.1} parent=1 // pred_check_branch
      %973 = sbr.rel (0) target = $region47
    $region46: #{linear_ae_lc_forward.1} parent=1 // pred_region
      _
    $region47: #{linear_ae_lc_forward.1} parent=1 // pred_fallthru
      _

</llo_original>
